<compile_context>
chip_gen: v7x
topology: tpu7x:2x2x1
jax: 0.10.0
libtpu: 0.0.40
codegen_flags: <defaults>
</compile_context>

<pallas_src>
import functools

import jax
import jax.numpy as jnp
import numpy as np
from jax.experimental import pallas as pl
from jax.experimental.pallas import tpu as pltpu


def _pick_tile_rows(n_rows: int, n_cols: int, itemsize: int, b_pad: int,
                    num_cores: int) -> int:
    """Row-tile size: byte-budgeted (not row-capped), sublane aligned."""
    sublane = {4: 8, 2: 16, 1: 32}.get(itemsize, 8)
    # ~4 MiB feats tile: sits on the measured HBM-roofline plateau (1-4 MiB) and
    # keeps the double-buffered pair at 8 MiB — well under the 32 MiB scoped limit
    # we request below, and safe on every generation (v7x physical VMEM is 64 MiB).
    tile_target = 4 * 1024 * 1024
    # Bound the in-flight (B_pad, TR) one-hot / iota intermediates (int32 worst case)
    # so tiny-C inputs can't blow VMEM with an enormous contraction dim.
    onehot_budget = 1 * 1024 * 1024
    tr = tile_target // max(1, n_cols * itemsize)
    tr = min(tr, onehot_budget // max(4, b_pad * 4))
    tr = max(sublane, (tr // sublane) * sublane)
    # Don't over-pad tiny inputs: never exceed (sublane-aligned) rows per core sweep.
    per_core = -(-n_rows // num_cores)
    per_core = -(-per_core // sublane) * sublane
    return max(sublane, min(tr, per_core))


def _global_avgpool_kernel(starts_ref, ends_ref, feats_ref, out_ref, *,
                           tile_rows, tiles_per_core, n_valid_rows,
                           needs_row_mask, oh_dtype, mxu_precision):
    c = pl.program_id(0)   # core-parallel split of the row-tile range
    t = pl.program_id(1)   # serial reduction over this core's row tiles

    @pl.when(t == 0)
    def _():
        out_ref[...] = jnp.zeros_like(out_ref)

    n_seg = starts_ref.shape[0]
    g = c * tiles_per_core + t          # global tile index
    base = g * tile_rows                # global row index of this tile's first row

    # (B_pad, TR) membership one-hot: row r belongs to segment b iff
    # starts[b] <= r < ends[b].  Built in the feature dtype (0/1 is exact in bf16)
    # so the MXU runs its native single-pass path for low-precision features.
    row = base + jax.lax.broadcasted_iota(jnp.int32, (n_seg, tile_rows), 1)
    one_hot = ((row >= starts_ref[...]) & (row < ends_ref[...])).astype(oh_dtype)

    feats = feats_ref[...]
    if needs_row_mask:
        # Partial tail tile (and any duplicated overflow tiles): zero rows >= N so
        # 0 * uninitialized-NaN can't poison the accumulator.  `needs_row_mask` is a
        # Python bool — this branch is only emitted when the grid over-covers N.
        row_col = base + jax.lax.broadcasted_iota(jnp.int32, (tile_rows, 1), 0)
        feats = jnp.where(row_col < n_valid_rows, feats, 0)

    # Segmented sum on the MXU: (B_pad, TR) @ (TR, C) -> (B_pad, C), f32 accumulation
    # directly into the VMEM-resident output block (its index is invariant over t).
    contrib = jnp.dot(one_hot, feats,
                      preferred_element_type=jnp.float32,
                      precision=mxu_precision)
    out_ref[0] += contrib


def global_avgpool(feats: jax.Array, offsets: jax.Array, *,
                   num_cores: int = 1, tile_rows: int | None = None) -> jax.Array:
    """Per-batch-sample mean over ragged point features.

    feats:   (N, C) float array
    offsets: (B+1,) int32 cumulative point counts
    returns: (B, C) per-sample mean (feats dtype)

    num_cores: 1 for v5e/v6e (single TensorCore); 2 to shard the row range across
               TensorCores on megacore-style parts (leading "parallel" grid axis).
    """
    orig_dtype = feats.dtype
    N, C = feats.shape
    offsets = offsets.astype(jnp.int32)
    B = offsets.shape[0] - 1
    B_pad = max(8, -(-B // 8) * 8)          # sublane-pad the segment axis

    itemsize = jnp.dtype(feats.dtype).itemsize
    sublane = {4: 8, 2: 16, 1: 32}.get(itemsize, 8)

    # One-hot in the feature dtype for 16-bit features (0/1 exact, native MXU path);
    # f32 features keep an f32 one-hot and a HIGHEST-precision dot (true f32 reduce).
    oh_dtype = feats.dtype if itemsize == 2 else jnp.float32
    mxu_precision = (jax.lax.Precision.HIGHEST
                     if jnp.dtype(feats.dtype) == jnp.dtype(jnp.float32) else None)

    if tile_rows is None:
        TR = _pick_tile_rows(N, C, itemsize, B_pad, num_cores)
    else:
        TR = max(sublane, -(-int(tile_rows) // sublane) * sublane)

    n_tiles = -(-N // TR)
    tiles_per_core = -(-n_tiles // num_cores)
    total_rows = num_cores * tiles_per_core * TR
    needs_row_mask = total_rows > N         # grid over-covers N -> mask garbage rows

    # Padded segments are empty (start == end == offsets[-1]) so they contribute 0.
    pad_segs = B_pad - B
    if pad_segs:
        offsets_pad = jnp.concatenate(
            [offsets, jnp.full((pad_segs,), offsets[-1], jnp.int32)])
    else:
        offsets_pad = offsets
    starts = offsets_pad[:B_pad].reshape(B_pad, 1)
    ends = offsets_pad[1:B_pad + 1].reshape(B_pad, 1)

    # Feats index map: plain when the grid exactly covers n_tiles; otherwise clamp the
    # block index so overflow tiles (num_cores > 1 only) re-read the last valid block
    # (their rows are all >= N and get masked / one-hot-zeroed anyway).
    if num_cores * tiles_per_core == n_tiles:
        feats_index_map = lambda c, t: (c * tiles_per_core + t, 0)
    else:
        last_block = n_tiles - 1
        feats_index_map = lambda c, t: (
            jnp.minimum(c * tiles_per_core + t, last_block), 0)

    kernel = functools.partial(
        _global_avgpool_kernel,
        tile_rows=TR, tiles_per_core=tiles_per_core, n_valid_rows=N,
        needs_row_mask=needs_row_mask, oh_dtype=oh_dtype,
        mxu_precision=mxu_precision)

    grid_spec = pltpu.PrefetchScalarGridSpec(
        num_scalar_prefetch=0,
        grid=(num_cores, tiles_per_core),
        in_specs=[
            pl.BlockSpec((B_pad, 1), lambda c, t: (0, 0)),   # starts (resident)
            pl.BlockSpec((B_pad, 1), lambda c, t: (0, 0)),   # ends   (resident)
            pl.BlockSpec((TR, C), feats_index_map),          # streamed row tiles
        ],
        out_specs=pl.BlockSpec((1, B_pad, C), lambda c, t: (c, 0, 0)),
    )

    cost = pl.CostEstimate(
        flops=2 * B_pad * N * C,
        transcendentals=0,
        bytes_accessed=N * C * itemsize + num_cores * B_pad * C * 4 + 2 * B_pad * 4,
    )

    partials = pl.pallas_call(
        kernel,
        out_shape=jax.ShapeDtypeStruct((num_cores, B_pad, C), jnp.float32),
        grid_spec=grid_spec,
        compiler_params=pltpu.CompilerParams(
            dimension_semantics=("parallel", "arbitrary"),
            vmem_limit_bytes=32 * 1024 * 1024),
        cost_estimate=cost,
    )(starts, ends, feats)

    # Tiny epilogue in XLA: add the per-core partials and divide by segment sizes.
    sums = partials.sum(axis=0)[:B]                                   # (B, C) f32
    counts = jnp.maximum(offsets[1:] - offsets[:-1], 1).astype(jnp.float32)
    # NOTE: empty segments return 0 here; PyTorch's mean over 0 points would be NaN.
    return (sums / counts[:, None]).astype(orig_dtype)


class GlobalAvgPool:
    """JAX/Pallas equivalent of ss_conv.pool.GlobalAvgPool (no parameters)."""

    def __call__(self, feats, offsets):
        # TODO(synk): SparseTensor input branch (inputs.features / get_offsets()) not
        # ported; only the raw (feats, offsets) path is implemented.
        assert offsets is not None
        return global_avgpool(feats, offsets)


def _ref_pool(feats_np, offsets_np):
    B = len(offsets_np) - 1
    return np.stack(
        [np.asarray(feats_np[offsets_np[b]:offsets_np[b + 1]], np.float32).mean(0)
         for b in range(B)], axis=0)


if __name__ == "__main__":
    key = jax.random.PRNGKey(0)
    pool = GlobalAvgPool()

    # Test 1: small f32 case, single exact tile.
    counts1 = np.array([10, 14], dtype=np.int32)
    off1 = np.concatenate([[0], np.cumsum(counts1)]).astype(np.int32)
    N1, C = int(off1[-1]), 128
    k1, k2 = jax.random.split(key)
    feats1 = jax.random.normal(k1, (N1, C), dtype=jnp.float32)
    out1 = jax.block_until_ready(pool(feats1, jnp.asarray(off1)))
    np.testing.assert_allclose(np.asarray(out1), _ref_pool(np.asarray(feats1), off1),
                               rtol=1e-5, atol=1e-5)

    # Test 2: f32 with a forced small tile -> multi-tile accumulation + masked tail.
    counts2 = np.array([7, 9, 13], dtype=np.int32)
    off2 = np.concatenate([[0], np.cumsum(counts2)]).astype(np.int32)
    N2 = int(off2[-1])
    feats2 = jax.random.normal(k2, (N2, C), dtype=jnp.float32)
    out2 = jax.block_until_ready(
        global_avgpool(feats2, jnp.asarray(off2), tile_rows=8))
    np.testing.assert_allclose(np.asarray(out2), _ref_pool(np.asarray(feats2), off2),
                               rtol=1e-5, atol=1e-5)

    # Test 3: bf16 features -> bf16 one-hot, native MXU path, masked tail.
    feats3 = feats1.astype(jnp.bfloat16)
    out3 = jax.block_until_ready(
        global_avgpool(feats3, jnp.asarray(off1), tile_rows=16))
    np.testing.assert_allclose(np.asarray(out3, dtype=np.float32),
                               _ref_pool(np.asarray(feats3, dtype=np.float32), off1),
                               rtol=1e-2, atol=1e-2)

    print("KERNEL_OK")
</pallas_src>

<mosaic_0001>
module attributes {stable_mosaic.version = 11 : i64} {
  func.func @_global_avgpool_kernel(%arg0: i32, %arg1: i32, %arg2: memref<8x1xi32, #tpu.memory_space<vmem>>, %arg3: memref<8x1xi32, #tpu.memory_space<vmem>>, %arg4: memref<24x128xf32, #tpu.memory_space<vmem>>, %arg5: memref<1x8x128xf32, #tpu.memory_space<vmem>>) attributes {dimension_semantics = [#tpu.dimension_semantics<parallel>, #tpu.dimension_semantics<arbitrary>], iteration_bounds = array<i64: 1, 1>, scalar_prefetch = 0 : i64, scratch_operands = 0 : i64, tpu.core_type = #tpu.core_type<tc>, window_params = [{pipeline_mode = #tpu.pipeline_mode<synchronous>, transform_indices = @transform_0, window_bounds = array<i64: 8, 1>}, {pipeline_mode = #tpu.pipeline_mode<synchronous>, transform_indices = @transform_1, window_bounds = array<i64: 8, 1>}, {transform_indices = @transform_2, window_bounds = array<i64: 24, 128>}, {transform_indices = @transform_3, window_bounds = array<i64: 1, 8, 128>}]} {
    %c0_i32 = arith.constant 0 : i32
    %0 = arith.cmpi eq, %arg1, %c0_i32 : i32
    %1 = arith.extui %0 : i1 to i32
    %c0_i32_0 = arith.constant 0 : i32
    %2 = arith.cmpi ne, %1, %c0_i32_0 : i32
    scf.if %2 {
      %cst_12 = arith.constant 0.000000e+00 : f32
      %26 = vector.broadcast %cst_12 : f32 to vector<1x8x128xf32>
      %c0_13 = arith.constant 0 : index
      %c0_14 = arith.constant 0 : index
      %c0_15 = arith.constant 0 : index
      %27 = vector.load %arg5[%c0_13, %c0_14, %c0_15] : memref<1x8x128xf32, #tpu.memory_space<vmem>>, vector<1x8x128xf32>
      tpu.vector_store %arg5[%c0_13, %c0_14, %c0_15], %26 {strides = array<i32>} : memref<1x8x128xf32, #tpu.memory_space<vmem>>, vector<1x8x128xf32>,
    } else {
    }
    %c1_i32 = arith.constant 1 : i32
    %3 = arith.muli %arg0, %c1_i32 : i32
    %4 = arith.addi %3, %arg1 : i32
    %c24_i32 = arith.constant 24 : i32
    %5 = arith.muli %4, %c24_i32 : i32
    %6 = tpu.iota {dimensions = array<i32: 1>} : vector<8x24xi32>
    %7 = vector.broadcast %5 : i32 to vector<8x24xi32>
    %8 = arith.addi %7, %6 : vector<8x24xi32>
    %c0 = arith.constant 0 : index
    %c0_1 = arith.constant 0 : index
    %9 = vector.load %arg2[%c0, %c0_1] : memref<8x1xi32, #tpu.memory_space<vmem>>, vector<8x1xi32>
    %10 = vector.broadcast %9 : vector<8x1xi32> to vector<8x24xi32>
    %11 = arith.cmpi sge, %8, %10 : vector<8x24xi32>
    %c0_2 = arith.constant 0 : index
    %c0_3 = arith.constant 0 : index
    %12 = vector.load %arg3[%c0_2, %c0_3] : memref<8x1xi32, #tpu.memory_space<vmem>>, vector<8x1xi32>
    %13 = vector.broadcast %12 : vector<8x1xi32> to vector<8x24xi32>
    %14 = arith.cmpi slt, %8, %13 : vector<8x24xi32>
    %15 = arith.andi %11, %14 : vector<8x24xi1>
    %16 = arith.extui %15 : vector<8x24xi1> to vector<8x24xi32>
    %17 = arith.sitofp %16 : vector<8x24xi32> to vector<8x24xf32>
    %c0_4 = arith.constant 0 : index
    %c0_5 = arith.constant 0 : index
    %18 = vector.load %arg4[%c0_4, %c0_5] : memref<24x128xf32, #tpu.memory_space<vmem>>, vector<24x128xf32>
    %cst = arith.constant dense<0.000000e+00> : vector<8x128xf32>
    %19 = tpu.matmul %17, %18, %cst {dimension_numbers = #tpu.dot_dimension_numbers<[1], [0], [0], [1], [0, 0, 1, 1], [], []>, precision = #tpu.contract_precision<fp32>} : vector<8x24xf32>, vector<24x128xf32>, vector<8x128xf32> -> vector<8x128xf32>
    %c0_6 = arith.constant 0 : index
    %c0_7 = arith.constant 0 : index
    %c0_8 = arith.constant 0 : index
    %20 = vector.load %arg5[%c0_6, %c0_7, %c0_8] : memref<1x8x128xf32, #tpu.memory_space<vmem>>, vector<1x8x128xf32>
    %21 = vector.shape_cast %20 : vector<1x8x128xf32> to vector<8x128xf32>
    %22 = arith.addf %21, %19 : vector<8x128xf32>
    %c0_9 = arith.constant 0 : index
    %c0_10 = arith.constant 0 : index
    %c0_11 = arith.constant 0 : index
    %23 = vector.load %arg5[%c0_9, %c0_10, %c0_11] : memref<1x8x128xf32, #tpu.memory_space<vmem>>, vector<1x8x128xf32>
    %24 = vector.shape_cast %23 : vector<1x8x128xf32> to vector<8x128xf32>
    %25 = vector.shape_cast %22 : vector<8x128xf32> to vector<1x8x128xf32>
    tpu.vector_store %arg5[%c0_9, %c0_10, %c0_11], %25 {strides = array<i32>} : memref<1x8x128xf32, #tpu.memory_space<vmem>>, vector<1x8x128xf32>,
    return
  }
  func.func @transform_0(%arg0: i32, %arg1: i32) -> (i32, i32) {
    %c0_i32 = arith.constant 0 : i32
    %c0_i32_0 = arith.constant 0 : i32
    %c0_i32_1 = arith.constant 0 : i32
    return %c0_i32, %c0_i32_0 : i32, i32
  }
  func.func @transform_1(%arg0: i32, %arg1: i32) -> (i32, i32) {
    %c0_i32 = arith.constant 0 : i32
    %c0_i32_0 = arith.constant 0 : i32
    %c0_i32_1 = arith.constant 0 : i32
    return %c0_i32, %c0_i32_0 : i32, i32
  }
  func.func @transform_2(%arg0: i32, %arg1: i32) -> (i32, i32) {
    %c1_i32 = arith.constant 1 : i32
    %0 = arith.muli %arg0, %c1_i32 : i32
    %1 = arith.addi %0, %arg1 : i32
    %c0_i32 = arith.constant 0 : i32
    %c0_i32_0 = arith.constant 0 : i32
    return %1, %c0_i32 : i32, i32
  }
  func.func @transform_3(%arg0: i32, %arg1: i32) -> (i32, i32, i32) {
    %c0_i32 = arith.constant 0 : i32
    %c0_i32_0 = arith.constant 0 : i32
    %c0_i32_1 = arith.constant 0 : i32
    return %arg0, %c0_i32, %c0_i32_0 : i32, i32, i32
  }
}

</mosaic_0001>

<llo_original>
// kernel: tpu_custom_call.1
$region0: #{tpu_custom_call.1}
  #allocation0 [shape = 'u32[]', space=smem, size = 0x4, offset = 0x4, fixed_abs, tag = 'smem constant byte address 0x4 - core index']
  #allocation1 [shape = 'u32[144,128]{1,0:T(1,128)}', space=vmem, size = 0x12000, scoped, tag = 'internal scratch']
  %s0 = inlined_call_operand.vmem [shape: s32[8,1], index: 0, kind: input, shape index: {}]
  %s1 = inlined_call_operand.vmem [shape: s32[8,1], index: 1, kind: input, shape index: {}]
  %s2 = inlined_call_operand.vmem [shape: f32[24,128], index: 2, kind: input, shape index: {}]
  %s3 = inlined_call_operand.hbm [shape: f32[1,8,128], index: 3, kind: output, shape index: {}]
  %s4 = sld [smem:[#allocation0]]
  $region26: #{tpu_custom_call.1} parent=0
    _
  %s6 = ssub.s32 1, %s4
  %s7 = scalar_select 0, %s6, %s4
  $region1: #{tpu_custom_call.1} parent=0
    #allocation2 [shape = 'u8[4096]{0}', space=vmem, size = 0x1000, scoped, tag = 'output window, operand 0, single buffered']
    #allocation3 [shape = 's32[1]{0}', space=sflag, size = 0x4, scoped, tag = 'scoped memory for tpu_custom_call.1']
    %8 = vsyncpa [#allocation3], 0
    // Predicated region
    $region2: #{tpu_custom_call.1} parent=1 // pred_check
      _
    $region3: #{tpu_custom_call.1} parent=1 // pred_check_branch
      %10 = sbr.rel (0) target = $region5
    $region4: #{tpu_custom_call.1} parent=1 // pred_region
      _
    $region5: #{tpu_custom_call.1} parent=1 // pred_fallthru
      _
    // Predicated region
    $region6: #{tpu_custom_call.1} parent=1 // pred_check
      _
    $region7: #{tpu_custom_call.1} parent=1 // pred_check_branch
      %12 = sbr.rel (0) target = $region9
    $region8: #{tpu_custom_call.1} parent=1 // pred_region
      _
    $region9: #{tpu_custom_call.1} parent=1 // pred_fallthru
      _
    // Predicated region
    $region10: #{tpu_custom_call.1} parent=1 // pred_check
      _
    $region11: #{tpu_custom_call.1} parent=1 // pred_check_branch
      %14 = sbr.rel (0) target = $region13
    $region12: #{tpu_custom_call.1} parent=1 // pred_region
      %s15 = sadd.s32 0, 0
      %s16 = smul.u32 3, %s15
      %p17 = scmp.lt.s32.totalorder %s16, 2
      %s18 = scalar_select %p17, %s16, 2
      %s19 = smul.addr %s18, 8
      %s20 = scalar_lea.vmem %s2, %s19
      %s21 = sadd.s32 0, 0
      %s22 = smul.u32 3, %s21
    $region13: #{tpu_custom_call.1} parent=1 // pred_fallthru
      _
    %s23 = sadd.s32 0, 0
    %s24 = smul.u32 3, %s23
    %p25 = scmp.lt.s32.totalorder %s24, 2
    %s26 = scalar_select %p25, %s24, 2
    %s27 = smul.addr %s26, 8
    %s28 = scalar_lea.vmem %s2, %s27
    %s29 = sadd.s32 0, 0
    %s30 = smul.u32 3, %s29
    %p31 = scmp.lt.s32.totalorder %s30, 2
    %s32 = scalar_select %p31, %s30, 2
    %s33 = smul.addr %s32, 8
    %s34 = scalar_lea.vmem %s2, %s33
    %s35 = sadd.s32 0, 0
    %s36 = smul.u32 3, %s35
    %p37 = scmp.eq.s32.totalorder 0, 0
    // Predicated region
    $region14: #{tpu_custom_call.1} parent=1 // pred_check
      %p38 = pneg %p37
    $region15: #{tpu_custom_call.1} parent=1 // pred_check_branch
      %40 = sbr.rel (%p38) target = $region17
    $region16: #{tpu_custom_call.1} parent=1 // pred_region
      %41 = vst [vmem:[#allocation2] sm:$0xff] 0.0
    $region17: #{tpu_custom_call.1} parent=1 // pred_fallthru
      _
    %s42 = sadd.s32 0, 0
    %s43 = smul.u32 %s42, 24
    %v44 = vlaneseq
    %v45 = vand.u32 %v44, 127
    %v46 = vstv %s43
    %v47 = vadd.s32 %v46, %v45
    %v48 = vld [vmem:[%s0] sm:$0xff]
    %49 = vset.pattern.permute.xlu0 0
    %50 = vperm.xlu0 %49, %v48
    %v51 = vpop.permute.xlu0 %50
    %vm52 = vcmp.ge.s32.totalorder %v47, %v51
    %v53 = vld [vmem:[%s1] sm:$0xff]
    %54 = vset.pattern.permute.xlu0 0
    %55 = vperm.xlu0 %54, %v53
    %v56 = vpop.permute.xlu0 %55
    %vm57 = vcmp.lt.s32.totalorder %v47, %v56
    %vm58 = vmand %vm52, %vm57
    %v59 = vsel %vm58, 1, 0
    %v60 = vcvt.s32.f32 %v59
    %v61 = vld [vmem:[%s34] sm:$0xff]
    %v62 = vld [vmem:[%s34 + $0x8] sm:$0xff]
    %v63 = vld [vmem:[%s34 + $0x10] sm:$0xff]
    %vm64 = vcmask 195584
    %v66 = vsel %vm64, %v60, 0
    %68 = vmatprep.subr.mxu0 0.0
    %v69 = vand.u32 %v61, 4294901760
    %70 = vmatpush1.msra.mxu0 %v69
    %71 = vmatprep.subr.mxu0 0.0
    %v72 = vand.u32 %v62, 4294901760
    %73 = vmatpush1.msra.mxu0 %v72
    %74 = vmatprep.subr.mxu0 0.0
    %v75 = vand.u32 %v63, 4294901760
    %76 = vmatpush1.msra.mxu0 %v75
    %77 = vmatprep.subr.mxu0 0.0
    %78 = vmatpush1.msra.mxu0 0.0
    %79 = vmatprep.subr.mxu0 0.0
    %80 = vmatpush1.msra.mxu0 0.0
    %81 = vmatprep.subr.mxu0 0.0
    %82 = vmatpush1.msra.mxu0 0.0
    %83 = vmatprep.subr.mxu0 0.0
    %84 = vmatpush1.msra.mxu0 0.0
    %85 = vmatprep.subr.mxu0 0.0
    %86 = vmatpush1.msra.mxu0 0.0
    %87 = vmatprep.subr.mxu0 0.0
    %88 = vmatpush1.msra.mxu0 0.0
    %89 = vmatprep.subr.mxu0 0.0
    %90 = vmatpush1.msra.mxu0 0.0
    %91 = vmatprep.subr.mxu0 0.0
    %92 = vmatpush1.msra.mxu0 0.0
    %93 = vmatprep.subr.mxu0 0.0
    %94 = vmatpush1.msra.mxu0 0.0
    %95 = vmatprep.subr.mxu0 0.0
    %96 = vmatpush1.msra.mxu0 0.0
    %97 = vmatprep.subr.mxu0 0.0
    %98 = vmatpush1.msra.mxu0 0.0
    %99 = vmatprep.subr.mxu0 0.0
    %100 = vmatpush1.msra.mxu0 0.0
    %101 = vmatprep.subr.mxu0 0.0
    %102 = vmatpush1.msra.mxu0 0.0
    %103 = vmatprep.subr.mxu0 0.0
    %104 = vmatpush1.msra.mxu0 0.0
    %105 = vmatprep.subr.mxu0 0.0
    %106 = vmatpush1.msra.mxu0 0.0
    %107 = vmatprep.subr.mxu0 0.0
    %108 = vmatpush1.msra.mxu0 0.0
    %109 = vmatprep.subr.mxu0 0.0
    %110 = vmatpush1.msra.mxu0 0.0
    %111 = vmatprep.subr.mxu0 0.0
    %112 = vmatpush1.msra.mxu0 0.0
    %113 = vmatprep.subr.mxu0 0.0
    %114 = vmatpush1.msra.mxu0 0.0
    %115 = vmatprep.subr.mxu0 0.0
    %116 = vmatpush1.msra.mxu0 0.0
    %117 = vmatprep.subr.mxu0 0.0
    %118 = vmatpush1.msra.mxu0 0.0
    %119 = vmatprep.subr.mxu0 0.0
    %120 = vmatpush1.msra.mxu0 0.0
    %121 = vmatprep.subr.mxu0 0.0
    %122 = vmatpush1.msra.mxu0 0.0
    %123 = vmatprep.subr.mxu0 0.0
    %124 = vmatpush1.msra.mxu0 0.0
    %125 = vmatprep.subr.mxu0 0.0
    %126 = vmatpush1.msra.mxu0 0.0
    %127 = vmatprep.subr.mxu0 0.0
    %128 = vmatpush1.msra.mxu0 0.0
    %129 = vmatprep.subr.mxu0 0.0
    %130 = vmatpush1.msra.mxu0 0.0
    %131 = vmatprep.subr.mxu0 0.0
    %132 = vmatpush1.msra.mxu0 0.0
    %133 = vmatprep.subr.mxu0 0.0
    %134 = vmatpush1.msra.mxu0 0.0
    %135 = vmatprep.mubr.f32.mxu0 0.0
    %v136 = vand.u32 %v66, 4294901760
    %v137 = vsub.f32 %v66, %v136
    %v138 = vand.u32 %v137, 4294901760
    %v139 = vsub.f32 %v137, %v138
    %v140 = vand.u32 %v139, 4294901760
    %141 = vmatmul.mubr.f32.gmra.mrb[0].mxu0 %v140
    %v142 = vpop.f32.mrb[0].mxu0
    %v143 = vadd.f32 0.0, %v142
    %v144 = vpop.f32.mrb[0].mxu0
    %145 = vdwg.mxu0
    %146 = vmatprep.subr.mxu0 0.0
    %v147 = vand.u32 %v61, 4294901760
    %v148 = vsub.f32 %v61, %v147
    %v149 = vand.u32 %v148, 4294901760
    %v150 = vsub.f32 %v148, %v149
    %v151 = vand.u32 %v150, 4294901760
    %152 = vmatpush1.msra.mxu0 %v151
    %153 = vmatprep.subr.mxu0 0.0
    %v154 = vand.u32 %v62, 4294901760
    %v155 = vsub.f32 %v62, %v154
    %v156 = vand.u32 %v155, 4294901760
    %v157 = vsub.f32 %v155, %v156
    %v158 = vand.u32 %v157, 4294901760
    %159 = vmatpush1.msra.mxu0 %v158
    %160 = vmatprep.subr.mxu0 0.0
    %v161 = vand.u32 %v63, 4294901760
    %v162 = vsub.f32 %v63, %v161
    %v163 = vand.u32 %v162, 4294901760
    %v164 = vsub.f32 %v162, %v163
    %v165 = vand.u32 %v164, 4294901760
    %166 = vmatpush1.msra.mxu0 %v165
    %167 = vmatprep.subr.mxu0 0.0
    %168 = vmatpush1.msra.mxu0 0.0
    %169 = vmatprep.subr.mxu0 0.0
    %170 = vmatpush1.msra.mxu0 0.0
    %171 = vmatprep.subr.mxu0 0.0
    %172 = vmatpush1.msra.mxu0 0.0
    %173 = vmatprep.subr.mxu0 0.0
    %174 = vmatpush1.msra.mxu0 0.0
    %175 = vmatprep.subr.mxu0 0.0
    %176 = vmatpush1.msra.mxu0 0.0
    %177 = vmatprep.subr.mxu0 0.0
    %178 = vmatpush1.msra.mxu0 0.0
    %179 = vmatprep.subr.mxu0 0.0
    %180 = vmatpush1.msra.mxu0 0.0
    %181 = vmatprep.subr.mxu0 0.0
    %182 = vmatpush1.msra.mxu0 0.0
    %183 = vmatprep.subr.mxu0 0.0
    %184 = vmatpush1.msra.mxu0 0.0
    %185 = vmatprep.subr.mxu0 0.0
    %186 = vmatpush1.msra.mxu0 0.0
    %187 = vmatprep.subr.mxu0 0.0
    %188 = vmatpush1.msra.mxu0 0.0
    %189 = vmatprep.subr.mxu0 0.0
    %190 = vmatpush1.msra.mxu0 0.0
    %191 = vmatprep.subr.mxu0 0.0
    %192 = vmatpush1.msra.mxu0 0.0
    %193 = vmatprep.subr.mxu0 0.0
    %194 = vmatpush1.msra.mxu0 0.0
    %195 = vmatprep.subr.mxu0 0.0
    %196 = vmatpush1.msra.mxu0 0.0
    %197 = vmatprep.subr.mxu0 0.0
    %198 = vmatpush1.msra.mxu0 0.0
    %199 = vmatprep.subr.mxu0 0.0
    %200 = vmatpush1.msra.mxu0 0.0
    %201 = vmatprep.subr.mxu0 0.0
    %202 = vmatpush1.msra.mxu0 0.0
    %203 = vmatprep.subr.mxu0 0.0
    %204 = vmatpush1.msra.mxu0 0.0
    %205 = vmatprep.subr.mxu0 0.0
    %206 = vmatpush1.msra.mxu0 0.0
    %207 = vmatprep.subr.mxu0 0.0
    %208 = vmatpush1.msra.mxu0 0.0
    %209 = vmatprep.subr.mxu0 0.0
    %210 = vmatpush1.msra.mxu0 0.0
    %211 = vmatprep.subr.mxu0 0.0
    %212 = vmatpush1.msra.mxu0 0.0
    %213 = vmatprep.subr.mxu0 0.0
    %214 = vmatpush1.msra.mxu0 0.0
    %215 = vmatprep.subr.mxu0 0.0
    %216 = vmatpush1.msra.mxu0 0.0
    %217 = vmatprep.subr.mxu0 0.0
    %218 = vmatpush1.msra.mxu0 0.0
    %219 = vmatprep.subr.mxu0 0.0
    %220 = vmatpush1.msra.mxu0 0.0
    %221 = vmatprep.subr.mxu0 0.0
    %222 = vmatpush1.msra.mxu0 0.0
    %223 = vmatprep.subr.mxu0 0.0
    %224 = vmatpush1.msra.mxu0 0.0
    %225 = vmatprep.mubr.f32.mxu0 0.0
    %v226 = vand.u32 %v66, 4294901760
    %227 = vmatmul.mubr.f32.gmra.mrb[0].mxu0 %v226
    %v228 = vpop.f32.mrb[0].mxu0
    %v229 = vadd.f32 %v143, %v228
    %v230 = vpop.f32.mrb[0].mxu0
    %231 = vdwg.mxu0
    %232 = vmatprep.subr.mxu0 0.0
    %v233 = vand.u32 %v61, 4294901760
    %v234 = vsub.f32 %v61, %v233
    %235 = vmatpush1.msra.mxu0 %v234
    %236 = vmatprep.subr.mxu0 0.0
    %v237 = vand.u32 %v62, 4294901760
    %v238 = vsub.f32 %v62, %v237
    %239 = vmatpush1.msra.mxu0 %v238
    %240 = vmatprep.subr.mxu0 0.0
    %v241 = vand.u32 %v63, 4294901760
    %v242 = vsub.f32 %v63, %v241
    %243 = vmatpush1.msra.mxu0 %v242
    %244 = vmatprep.subr.mxu0 0.0
    %245 = vmatpush1.msra.mxu0 0.0
    %246 = vmatprep.subr.mxu0 0.0
    %247 = vmatpush1.msra.mxu0 0.0
    %248 = vmatprep.subr.mxu0 0.0
    %249 = vmatpush1.msra.mxu0 0.0
    %250 = vmatprep.subr.mxu0 0.0
    %251 = vmatpush1.msra.mxu0 0.0
    %252 = vmatprep.subr.mxu0 0.0
    %253 = vmatpush1.msra.mxu0 0.0
    %254 = vmatprep.subr.mxu0 0.0
    %255 = vmatpush1.msra.mxu0 0.0
    %256 = vmatprep.subr.mxu0 0.0
    %257 = vmatpush1.msra.mxu0 0.0
    %258 = vmatprep.subr.mxu0 0.0
    %259 = vmatpush1.msra.mxu0 0.0
    %260 = vmatprep.subr.mxu0 0.0
    %261 = vmatpush1.msra.mxu0 0.0
    %262 = vmatprep.subr.mxu0 0.0
    %263 = vmatpush1.msra.mxu0 0.0
    %264 = vmatprep.subr.mxu0 0.0
    %265 = vmatpush1.msra.mxu0 0.0
    %266 = vmatprep.subr.mxu0 0.0
    %267 = vmatpush1.msra.mxu0 0.0
    %268 = vmatprep.subr.mxu0 0.0
    %269 = vmatpush1.msra.mxu0 0.0
    %270 = vmatprep.subr.mxu0 0.0
    %271 = vmatpush1.msra.mxu0 0.0
    %272 = vmatprep.subr.mxu0 0.0
    %273 = vmatpush1.msra.mxu0 0.0
    %274 = vmatprep.subr.mxu0 0.0
    %275 = vmatpush1.msra.mxu0 0.0
    %276 = vmatprep.subr.mxu0 0.0
    %277 = vmatpush1.msra.mxu0 0.0
    %278 = vmatprep.subr.mxu0 0.0
    %279 = vmatpush1.msra.mxu0 0.0
    %280 = vmatprep.subr.mxu0 0.0
    %281 = vmatpush1.msra.mxu0 0.0
    %282 = vmatprep.subr.mxu0 0.0
    %283 = vmatpush1.msra.mxu0 0.0
    %284 = vmatprep.subr.mxu0 0.0
    %285 = vmatpush1.msra.mxu0 0.0
    %286 = vmatprep.subr.mxu0 0.0
    %287 = vmatpush1.msra.mxu0 0.0
    %288 = vmatprep.subr.mxu0 0.0
    %289 = vmatpush1.msra.mxu0 0.0
    %290 = vmatprep.subr.mxu0 0.0
    %291 = vmatpush1.msra.mxu0 0.0
    %292 = vmatprep.subr.mxu0 0.0
    %293 = vmatpush1.msra.mxu0 0.0
    %294 = vmatprep.subr.mxu0 0.0
    %295 = vmatpush1.msra.mxu0 0.0
    %296 = vmatprep.subr.mxu0 0.0
    %297 = vmatpush1.msra.mxu0 0.0
    %298 = vmatprep.subr.mxu0 0.0
    %299 = vmatpush1.msra.mxu0 0.0
    %300 = vmatprep.subr.mxu0 0.0
    %301 = vmatpush1.msra.mxu0 0.0
    %302 = vmatprep.mubr.f32.mxu0 0.0
    %v303 = vand.u32 %v66, 4294901760
    %v304 = vsub.f32 %v66, %v303
    %305 = vmatmul.mubr.f32.gmra.mrb[0].mxu0 %v304
    %v306 = vpop.f32.mrb[0].mxu0
    %v307 = vadd.f32 %v229, %v306
    %v308 = vpop.f32.mrb[0].mxu0
    %309 = vdwg.mxu0
    %310 = vmatprep.subr.mxu0 0.0
    %v311 = vand.u32 %v61, 4294901760
    %312 = vmatpush1.msra.mxu0 %v311
    %313 = vmatprep.subr.mxu0 0.0
    %v314 = vand.u32 %v62, 4294901760
    %315 = vmatpush1.msra.mxu0 %v314
    %316 = vmatprep.subr.mxu0 0.0
    %v317 = vand.u32 %v63, 4294901760
    %318 = vmatpush1.msra.mxu0 %v317
    %319 = vmatprep.subr.mxu0 0.0
    %320 = vmatpush1.msra.mxu0 0.0
    %321 = vmatprep.subr.mxu0 0.0
    %322 = vmatpush1.msra.mxu0 0.0
    %323 = vmatprep.subr.mxu0 0.0
    %324 = vmatpush1.msra.mxu0 0.0
    %325 = vmatprep.subr.mxu0 0.0
    %326 = vmatpush1.msra.mxu0 0.0
    %327 = vmatprep.subr.mxu0 0.0
    %328 = vmatpush1.msra.mxu0 0.0
    %329 = vmatprep.subr.mxu0 0.0
    %330 = vmatpush1.msra.mxu0 0.0
    %331 = vmatprep.subr.mxu0 0.0
    %332 = vmatpush1.msra.mxu0 0.0
    %333 = vmatprep.subr.mxu0 0.0
    %334 = vmatpush1.msra.mxu0 0.0
    %335 = vmatprep.subr.mxu0 0.0
    %336 = vmatpush1.msra.mxu0 0.0
    %337 = vmatprep.subr.mxu0 0.0
    %338 = vmatpush1.msra.mxu0 0.0
    %339 = vmatprep.subr.mxu0 0.0
    %340 = vmatpush1.msra.mxu0 0.0
    %341 = vmatprep.subr.mxu0 0.0
    %342 = vmatpush1.msra.mxu0 0.0
    %343 = vmatprep.subr.mxu0 0.0
    %344 = vmatpush1.msra.mxu0 0.0
    %345 = vmatprep.subr.mxu0 0.0
    %346 = vmatpush1.msra.mxu0 0.0
    %347 = vmatprep.subr.mxu0 0.0
    %348 = vmatpush1.msra.mxu0 0.0
    %349 = vmatprep.subr.mxu0 0.0
    %350 = vmatpush1.msra.mxu0 0.0
    %351 = vmatprep.subr.mxu0 0.0
    %352 = vmatpush1.msra.mxu0 0.0
    %353 = vmatprep.subr.mxu0 0.0
    %354 = vmatpush1.msra.mxu0 0.0
    %355 = vmatprep.subr.mxu0 0.0
    %356 = vmatpush1.msra.mxu0 0.0
    %357 = vmatprep.subr.mxu0 0.0
    %358 = vmatpush1.msra.mxu0 0.0
    %359 = vmatprep.subr.mxu0 0.0
    %360 = vmatpush1.msra.mxu0 0.0
    %361 = vmatprep.subr.mxu0 0.0
    %362 = vmatpush1.msra.mxu0 0.0
    %363 = vmatprep.subr.mxu0 0.0
    %364 = vmatpush1.msra.mxu0 0.0
    %365 = vmatprep.subr.mxu0 0.0
    %366 = vmatpush1.msra.mxu0 0.0
    %367 = vmatprep.subr.mxu0 0.0
    %368 = vmatpush1.msra.mxu0 0.0
    %369 = vmatprep.subr.mxu0 0.0
    %370 = vmatpush1.msra.mxu0 0.0
    %371 = vmatprep.subr.mxu0 0.0
    %372 = vmatpush1.msra.mxu0 0.0
    %373 = vmatprep.subr.mxu0 0.0
    %374 = vmatpush1.msra.mxu0 0.0
    %375 = vmatprep.subr.mxu0 0.0
    %376 = vmatpush1.msra.mxu0 0.0
    %377 = vmatprep.mubr.f32.mxu0 0.0
    %v378 = vand.u32 %v66, 4294901760
    %v379 = vsub.f32 %v66, %v378
    %v380 = vand.u32 %v379, 4294901760
    %381 = vmatmul.mubr.f32.gmra.mrb[0].mxu0 %v380
    %v382 = vpop.f32.mrb[0].mxu0
    %v383 = vadd.f32 %v307, %v382
    %v384 = vpop.f32.mrb[0].mxu0
    %385 = vdwg.mxu0
    %386 = vmatprep.subr.mxu0 0.0
    %v387 = vand.u32 %v61, 4294901760
    %v388 = vsub.f32 %v61, %v387
    %v389 = vand.u32 %v388, 4294901760
    %390 = vmatpush1.msra.mxu0 %v389
    %391 = vmatprep.subr.mxu0 0.0
    %v392 = vand.u32 %v62, 4294901760
    %v393 = vsub.f32 %v62, %v392
    %v394 = vand.u32 %v393, 4294901760
    %395 = vmatpush1.msra.mxu0 %v394
    %396 = vmatprep.subr.mxu0 0.0
    %v397 = vand.u32 %v63, 4294901760
    %v398 = vsub.f32 %v63, %v397
    %v399 = vand.u32 %v398, 4294901760
    %400 = vmatpush1.msra.mxu0 %v399
    %401 = vmatprep.subr.mxu0 0.0
    %402 = vmatpush1.msra.mxu0 0.0
    %403 = vmatprep.subr.mxu0 0.0
    %404 = vmatpush1.msra.mxu0 0.0
    %405 = vmatprep.subr.mxu0 0.0
    %406 = vmatpush1.msra.mxu0 0.0
    %407 = vmatprep.subr.mxu0 0.0
    %408 = vmatpush1.msra.mxu0 0.0
    %409 = vmatprep.subr.mxu0 0.0
    %410 = vmatpush1.msra.mxu0 0.0
    %411 = vmatprep.subr.mxu0 0.0
    %412 = vmatpush1.msra.mxu0 0.0
    %413 = vmatprep.subr.mxu0 0.0
    %414 = vmatpush1.msra.mxu0 0.0
    %415 = vmatprep.subr.mxu0 0.0
    %416 = vmatpush1.msra.mxu0 0.0
    %417 = vmatprep.subr.mxu0 0.0
    %418 = vmatpush1.msra.mxu0 0.0
    %419 = vmatprep.subr.mxu0 0.0
    %420 = vmatpush1.msra.mxu0 0.0
    %421 = vmatprep.subr.mxu0 0.0
    %422 = vmatpush1.msra.mxu0 0.0
    %423 = vmatprep.subr.mxu0 0.0
    %424 = vmatpush1.msra.mxu0 0.0
    %425 = vmatprep.subr.mxu0 0.0
    %426 = vmatpush1.msra.mxu0 0.0
    %427 = vmatprep.subr.mxu0 0.0
    %428 = vmatpush1.msra.mxu0 0.0
    %429 = vmatprep.subr.mxu0 0.0
    %430 = vmatpush1.msra.mxu0 0.0
    %431 = vmatprep.subr.mxu0 0.0
    %432 = vmatpush1.msra.mxu0 0.0
    %433 = vmatprep.subr.mxu0 0.0
    %434 = vmatpush1.msra.mxu0 0.0
    %435 = vmatprep.subr.mxu0 0.0
    %436 = vmatpush1.msra.mxu0 0.0
    %437 = vmatprep.subr.mxu0 0.0
    %438 = vmatpush1.msra.mxu0 0.0
    %439 = vmatprep.subr.mxu0 0.0
    %440 = vmatpush1.msra.mxu0 0.0
    %441 = vmatprep.subr.mxu0 0.0
    %442 = vmatpush1.msra.mxu0 0.0
    %443 = vmatprep.subr.mxu0 0.0
    %444 = vmatpush1.msra.mxu0 0.0
    %445 = vmatprep.subr.mxu0 0.0
    %446 = vmatpush1.msra.mxu0 0.0
    %447 = vmatprep.subr.mxu0 0.0
    %448 = vmatpush1.msra.mxu0 0.0
    %449 = vmatprep.subr.mxu0 0.0
    %450 = vmatpush1.msra.mxu0 0.0
    %451 = vmatprep.subr.mxu0 0.0
    %452 = vmatpush1.msra.mxu0 0.0
    %453 = vmatprep.subr.mxu0 0.0
    %454 = vmatpush1.msra.mxu0 0.0
    %455 = vmatprep.subr.mxu0 0.0
    %456 = vmatpush1.msra.mxu0 0.0
    %457 = vmatprep.subr.mxu0 0.0
    %458 = vmatpush1.msra.mxu0 0.0
    %459 = vmatprep.mubr.f32.mxu0 0.0
    %v460 = vand.u32 %v66, 4294901760
    %461 = vmatmul.mubr.f32.gmra.mrb[0].mxu0 %v460
    %v462 = vpop.f32.mrb[0].mxu0
    %v463 = vadd.f32 %v383, %v462
    %v464 = vpop.f32.mrb[0].mxu0
    %465 = vdwg.mxu0
    %466 = vmatprep.subr.mxu0 0.0
    %v467 = vand.u32 %v61, 4294901760
    %468 = vmatpush1.msra.mxu0 %v467
    %469 = vmatprep.subr.mxu0 0.0
    %v470 = vand.u32 %v62, 4294901760
    %471 = vmatpush1.msra.mxu0 %v470
    %472 = vmatprep.subr.mxu0 0.0
    %v473 = vand.u32 %v63, 4294901760
    %474 = vmatpush1.msra.mxu0 %v473
    %475 = vmatprep.subr.mxu0 0.0
    %476 = vmatpush1.msra.mxu0 0.0
    %477 = vmatprep.subr.mxu0 0.0
    %478 = vmatpush1.msra.mxu0 0.0
    %479 = vmatprep.subr.mxu0 0.0
    %480 = vmatpush1.msra.mxu0 0.0
    %481 = vmatprep.subr.mxu0 0.0
    %482 = vmatpush1.msra.mxu0 0.0
    %483 = vmatprep.subr.mxu0 0.0
    %484 = vmatpush1.msra.mxu0 0.0
    %485 = vmatprep.subr.mxu0 0.0
    %486 = vmatpush1.msra.mxu0 0.0
    %487 = vmatprep.subr.mxu0 0.0
    %488 = vmatpush1.msra.mxu0 0.0
    %489 = vmatprep.subr.mxu0 0.0
    %490 = vmatpush1.msra.mxu0 0.0
    %491 = vmatprep.subr.mxu0 0.0
    %492 = vmatpush1.msra.mxu0 0.0
    %493 = vmatprep.subr.mxu0 0.0
    %494 = vmatpush1.msra.mxu0 0.0
    %495 = vmatprep.subr.mxu0 0.0
    %496 = vmatpush1.msra.mxu0 0.0
    %497 = vmatprep.subr.mxu0 0.0
    %498 = vmatpush1.msra.mxu0 0.0
    %499 = vmatprep.subr.mxu0 0.0
    %500 = vmatpush1.msra.mxu0 0.0
    %501 = vmatprep.subr.mxu0 0.0
    %502 = vmatpush1.msra.mxu0 0.0
    %503 = vmatprep.subr.mxu0 0.0
    %504 = vmatpush1.msra.mxu0 0.0
    %505 = vmatprep.subr.mxu0 0.0
    %506 = vmatpush1.msra.mxu0 0.0
    %507 = vmatprep.subr.mxu0 0.0
    %508 = vmatpush1.msra.mxu0 0.0
    %509 = vmatprep.subr.mxu0 0.0
    %510 = vmatpush1.msra.mxu0 0.0
    %511 = vmatprep.subr.mxu0 0.0
    %512 = vmatpush1.msra.mxu0 0.0
    %513 = vmatprep.subr.mxu0 0.0
    %514 = vmatpush1.msra.mxu0 0.0
    %515 = vmatprep.subr.mxu0 0.0
    %516 = vmatpush1.msra.mxu0 0.0
    %517 = vmatprep.subr.mxu0 0.0
    %518 = vmatpush1.msra.mxu0 0.0
    %519 = vmatprep.subr.mxu0 0.0
    %520 = vmatpush1.msra.mxu0 0.0
    %521 = vmatprep.subr.mxu0 0.0
    %522 = vmatpush1.msra.mxu0 0.0
    %523 = vmatprep.subr.mxu0 0.0
    %524 = vmatpush1.msra.mxu0 0.0
    %525 = vmatprep.subr.mxu0 0.0
    %526 = vmatpush1.msra.mxu0 0.0
    %527 = vmatprep.subr.mxu0 0.0
    %528 = vmatpush1.msra.mxu0 0.0
    %529 = vmatprep.subr.mxu0 0.0
    %530 = vmatpush1.msra.mxu0 0.0
    %531 = vmatprep.subr.mxu0 0.0
    %532 = vmatpush1.msra.mxu0 0.0
    %533 = vmatprep.mubr.f32.mxu0 0.0
    %v534 = vand.u32 %v66, 4294901760
    %535 = vmatmul.mubr.f32.gmra.mrb[0].mxu0 %v534
    %v536 = vpop.f32.mrb[0].mxu0
    %v537 = vadd.f32 %v463, %v536
    %v538 = vpop.f32.mrb[0].mxu0
    %539 = vdwg.mxu0
    %v540 = vld [vmem:[#allocation2] sm:$0xff]
    %v541 = vadd.f32 %v540, %v537
    %542 = vst [vmem:[#allocation2] sm:$0xff] %v541
    // Predicated region
    $region18: #{tpu_custom_call.1} parent=1 // pred_check
      _
    $region19: #{tpu_custom_call.1} parent=1 // pred_check_branch
      %544 = sbr.rel (0) target = $region21
    $region20: #{tpu_custom_call.1} parent=1 // pred_region
      %s546 = ssub.s32 128, 128
      %547 = vsyncadd [#allocation3], %s546
      %s549 = sshll.u32 [#allocation2], 4
      %s550 = int_to_ptr.vmem [resolvable:$true] %s549
      %552 = dma.vmem_to_hbm [thread:$0]  %s550, 128, %s3, [#allocation3]
    $region21: #{tpu_custom_call.1} parent=1 // pred_fallthru
      _
    // Predicated region
    $region22: #{tpu_custom_call.1} parent=1 // pred_check
      _
    $region23: #{tpu_custom_call.1} parent=1 // pred_check_branch
      %554 = sbr.rel (0) target = $region25
    $region24: #{tpu_custom_call.1} parent=1 // pred_region
      %555 = dma.done [#allocation3], 128
    $region25: #{tpu_custom_call.1} parent=1 // pred_fallthru
      _
    %556 = vsyncpa [#allocation3], 1

</llo_original>
